<compile_context>
chip_gen: v6e
topology: v6e:2x2x1
jax: 0.10.0
libtpu: 0.0.40
codegen_flags: <defaults>
</compile_context>

<pallas_src>
import functools

import jax
import jax.numpy as jnp
from jax.experimental import pallas as pl
from jax.experimental.pallas import tpu as pltpu


def _round_up(x, m):
    return -(-x // m) * m


def _conv1d_relu_kernel(x_ref, w_ref, b_ref, o_ref, *, K, Cin, Cout, T_out,
                        dilation, stride, use_mxu):
    """One lane tile of the batch-folded problem.

    x_ref: (1, Cin, T_in_pad)  folded + pre-padded input window (length on lanes)
    w_ref: (K, Cout, Cin)      [MXU path]  or  (Cin, K, Cout, 1)  [VPU path]
    b_ref: (Cout, 1)           f32 bias
    o_ref: (1, Cout, T_out)    lane-dense output tile (T_out % 128 == 0)
    """

    def tap(k):
        start = k * dilation                                   # static int
        if stride == 1:
            return x_ref[0, :, start:start + T_out]            # (Cin, T_out)
        # ref-level strided load keeps stride>1 off the value-gather path
        return x_ref[0, :, pl.ds(start, T_out, stride=stride)]

    acc = jnp.zeros((Cout, T_out), jnp.float32)
    if use_mxu:
        # K accumulating MXU contractions (Cout,Cin)@(Cin,T_out): no im2row
        # concatenate / sublane retiling; f32 accumulation over bf16 inputs.
        for k in range(K):
            acc = acc + jnp.dot(w_ref[k], tap(k),
                                preferred_element_type=jnp.float32)
    else:
        # VPU path for tiny channel counts: K*Cin outer-product FMAs across the
        # T_out lanes (no MXU fill/drain for a <1%-utilization matmul).
        w = w_ref[...]                                         # hoisted load
        for k in range(K):
            t = tap(k)                                         # (Cin, T_out)
            for cin in range(Cin):
                # (Cout, 1) * (1, T_out) -> (Cout, T_out)
                acc = acc + w[cin, k] * t[cin:cin + 1, :]

    acc = acc + b_ref[...]
    o_ref[0] = jnp.maximum(acc, 0.0).astype(o_ref.dtype)


def conv1d_relu_block(x, weight, bias, *, padding=2, dilation=1, stride=1):
    """x: (B, Cin, L) NCL; weight: (Cout, Cin, K); bias: (Cout,) -> (B, Cout, L_out)."""
    B, Cin, L = x.shape
    Cout, Cin_w, K = weight.shape
    assert Cin_w == Cin
    halo = dilation * (K - 1)
    L_out = (L + 2 * padding - halo - 1) // stride + 1
    assert L_out > 0, "empty output"

    # ---- fold batch into the lane axis ------------------------------------
    # Each batch element becomes a zero-padded segment of length Lp (rounded up
    # to a multiple of stride), laid back-to-back.  Output column b*Q + j
    # (Q = Lp // stride) reads input columns b*Lp + j*stride + k*dilation, which
    # stays inside segment b for every valid j < L_out, so segments never
    # contaminate each other; the (K-1)*dilation garbage columns per segment are
    # sliced away after the kernel (wrapper-side layout plumbing only).
    Lp = _round_up(L + 2 * padding, stride)
    Q = Lp // stride
    N_total = B * Q

    xpad = jnp.pad(x, ((0, 0), (0, 0), (padding, Lp - L - padding)))   # (B,Cin,Lp)
    xf = jnp.transpose(xpad, (1, 0, 2)).reshape(Cin, B * Lp)          # (Cin,B*Lp)

    # ---- compute path / dtypes ---------------------------------------------
    # MXU only pays once the per-tap contraction (Cin) and Cout are sizeable; at
    # the module's Cin=4 / Cout=8 the VPU path wins (crossover is even earlier
    # on v5e's 128-wide MXU, so the threshold is kept conservative).
    use_mxu = (Cin >= 8) and (Cout >= 16)
    in_dtype = x.dtype
    if use_mxu and x.dtype == jnp.float32:
        in_dtype = jnp.bfloat16          # bf16 MXU inputs, f32 accumulate/bias

    # ---- generation-aware VMEM budget and lane-tile size --------------------
    try:
        vmem_cap = int(pltpu.get_tpu_info().vmem_capacity_bytes)
    except Exception:
        vmem_cap = 64 * 2 ** 20
    vmem_limit = int(vmem_cap * 3 // 4)   # ~96 MiB on v5e/v6e, ~48 MiB on v7x

    in_bytes = jnp.dtype(in_dtype).itemsize
    out_bytes = jnp.dtype(x.dtype).itemsize
    # per output column: double-buffered input + output tiles + f32 accumulator
    per_col = 2 * Cin * stride * in_bytes + 2 * Cout * out_bytes + 4 * Cout
    t_cap = max(256, (vmem_limit // 2) // per_col // 256 * 256)
    T_out = min(_round_up(N_total, 128), t_cap)
    num_tiles = -(-N_total // T_out)
    # Give the v7x megacore (2 TensorCores) at least two parallel tiles when
    # there is enough work, even for B == 1.
    if num_tiles == 1 and N_total > 1024:
        T_out = _round_up(-(-N_total // 2), 128)
        num_tiles = -(-N_total // T_out)

    # ---- build overlapping lane tiles (halo baked in by the wrapper) --------
    T_in = (T_out - 1) * stride + halo + 1
    T_in_pad = _round_up(T_in, 128)
    total_in = (num_tiles - 1) * T_out * stride + T_in_pad
    xf = jnp.pad(xf, ((0, 0), (0, max(0, total_in - B * Lp))))[:, :total_in]
    if num_tiles == 1:
        x_tiles = xf[None]                                      # (1,Cin,T_in_pad)
    else:
        starts = jnp.arange(num_tiles, dtype=jnp.int32) * (T_out * stride)
        idx = starts[:, None] + jnp.arange(T_in_pad, dtype=jnp.int32)[None, :]
        x_tiles = jnp.transpose(xf[:, idx], (1, 0, 2))          # (nt,Cin,T_in_pad)
    x_tiles = x_tiles.astype(in_dtype)

    if use_mxu:
        w_arg = jnp.transpose(weight, (2, 0, 1)).astype(in_dtype)   # (K,Cout,Cin)
        w_spec = pl.BlockSpec((K, Cout, Cin), lambda t: (0, 0, 0))
    else:
        # w_ref[cin, k] is a (Cout, 1) column ready to broadcast along lanes.
        w_arg = jnp.transpose(weight, (1, 2, 0))[..., None]         # (Cin,K,Cout,1)
        w_spec = pl.BlockSpec((Cin, K, Cout, 1), lambda t: (0, 0, 0, 0))
    b_arg = bias.astype(jnp.float32).reshape(Cout, 1)

    kernel = functools.partial(
        _conv1d_relu_kernel, K=K, Cin=Cin, Cout=Cout, T_out=T_out,
        dilation=dilation, stride=stride, use_mxu=use_mxu)

    out_tiles = pl.pallas_call(
        kernel,
        out_shape=jax.ShapeDtypeStruct((num_tiles, Cout, T_out), x.dtype),
        grid=(num_tiles,),
        in_specs=[
            pl.BlockSpec((1, Cin, T_in_pad), lambda t: (t, 0, 0)),
            w_spec,
            pl.BlockSpec((Cout, 1), lambda t: (0, 0)),
        ],
        out_specs=pl.BlockSpec((1, Cout, T_out), lambda t: (t, 0, 0)),
        compiler_params=pltpu.CompilerParams(
            dimension_semantics=("parallel",),
            vmem_limit_bytes=vmem_limit,
        ),
    )(x_tiles, w_arg, b_arg)

    # ---- unfold: drop lane padding and per-batch zero gaps ------------------
    folded = jnp.transpose(out_tiles, (1, 0, 2)).reshape(Cout, num_tiles * T_out)
    out = folded[:, :N_total].reshape(Cout, B, Q)[:, :, :L_out]
    return jnp.transpose(out, (1, 0, 2))                          # (B, Cout, L_out)


if __name__ == "__main__":
    key = jax.random.PRNGKey(0)
    kx, kw, kb = jax.random.split(key, 3)

    # Shapes implied by the module: Conv1d(in_channels=4, out_channels=8, k=5, pad=2)
    B, Cin, Cout, L, K = 2, 4, 8, 16, 5
    x = jax.random.normal(kx, (B, Cin, L), dtype=jnp.float32)
    bound = 1.0 / jnp.sqrt(Cin * K)
    weight = jax.random.uniform(kw, (Cout, Cin, K), jnp.float32, -bound, bound)
    bias = jax.random.uniform(kb, (Cout,), jnp.float32, -bound, bound)

    out = conv1d_relu_block(x, weight, bias, padding=2, dilation=1, stride=1)
    out = jax.block_until_ready(out)

    # Reference: lax conv with nn.Conv1d semantics (NCL) + bias + ReLU.
    ref = jax.lax.conv_general_dilated(
        x, weight, window_strides=(1,), padding=[(2, 2)], rhs_dilation=(1,),
        dimension_numbers=("NCH", "OIH", "NCH"),
    ) + bias[None, :, None]
    ref = jnp.maximum(ref, 0.0)

    assert out.shape == ref.shape, (out.shape, ref.shape)
    assert jnp.allclose(out, ref, atol=1e-5, rtol=1e-5), \
        float(jnp.max(jnp.abs(out - ref)))

    print("KERNEL_OK")
</pallas_src>

<mosaic_0001>
module attributes {stable_mosaic.version = 11 : i64} {
  func.func @_conv1d_relu_kernel(%arg0: i32, %arg1: memref<1x4x256xf32, #tpu.memory_space<vmem>>, %arg2: memref<4x5x8x1xf32, #tpu.memory_space<vmem>>, %arg3: memref<8x1xf32, #tpu.memory_space<vmem>>, %arg4: memref<1x8x128xf32, #tpu.memory_space<vmem>>) attributes {dimension_semantics = [#tpu.dimension_semantics<parallel>], iteration_bounds = array<i64: 1>, scalar_prefetch = 0 : i64, scratch_operands = 0 : i64, tpu.core_type = #tpu.core_type<tc>, window_params = [{transform_indices = @transform_0, window_bounds = array<i64: 1, 4, 256>}, {pipeline_mode = #tpu.pipeline_mode<synchronous>, transform_indices = @transform_1, window_bounds = array<i64: 4, 5, 8, 1>}, {pipeline_mode = #tpu.pipeline_mode<synchronous>, transform_indices = @transform_2, window_bounds = array<i64: 8, 1>}, {transform_indices = @transform_3, window_bounds = array<i64: 1, 8, 128>}]} {
    %cst = arith.constant 0.000000e+00 : f32
    %0 = vector.broadcast %cst : f32 to vector<8x128xf32>
    %c0 = arith.constant 0 : index
    %c0_0 = arith.constant 0 : index
    %c0_1 = arith.constant 0 : index
    %c0_2 = arith.constant 0 : index
    %1 = vector.load %arg2[%c0, %c0_0, %c0_1, %c0_2] : memref<4x5x8x1xf32, #tpu.memory_space<vmem>>, vector<4x5x8x1xf32>
    %c0_3 = arith.constant 0 : index
    %c0_4 = arith.constant 0 : index
    %c0_5 = arith.constant 0 : index
    %2 = vector.load %arg1[%c0_3, %c0_4, %c0_5] : memref<1x4x256xf32, #tpu.memory_space<vmem>>, vector<1x4x128xf32>
    %3 = vector.shape_cast %2 : vector<1x4x128xf32> to vector<4x128xf32>
    %4 = vector.extract_strided_slice %1 {offsets = [0, 0, 0, 0], sizes = [1, 1, 8, 1], strides = [1, 1, 1, 1]} : vector<4x5x8x1xf32> to vector<1x1x8x1xf32>
    %5 = vector.shape_cast %4 : vector<1x1x8x1xf32> to vector<8x1xf32>
    %6 = vector.extract_strided_slice %3 {offsets = [0, 0], sizes = [1, 128], strides = [1, 1]} : vector<4x128xf32> to vector<1x128xf32>
    %7 = vector.broadcast %5 : vector<8x1xf32> to vector<8x128xf32>
    %8 = vector.broadcast %6 : vector<1x128xf32> to vector<8x128xf32>
    %9 = arith.mulf %7, %8 : vector<8x128xf32>
    %10 = arith.addf %0, %9 : vector<8x128xf32>
    %11 = vector.extract_strided_slice %1 {offsets = [1, 0, 0, 0], sizes = [1, 1, 8, 1], strides = [1, 1, 1, 1]} : vector<4x5x8x1xf32> to vector<1x1x8x1xf32>
    %12 = vector.shape_cast %11 : vector<1x1x8x1xf32> to vector<8x1xf32>
    %13 = vector.extract_strided_slice %3 {offsets = [1, 0], sizes = [1, 128], strides = [1, 1]} : vector<4x128xf32> to vector<1x128xf32>
    %14 = vector.broadcast %12 : vector<8x1xf32> to vector<8x128xf32>
    %15 = vector.broadcast %13 : vector<1x128xf32> to vector<8x128xf32>
    %16 = arith.mulf %14, %15 : vector<8x128xf32>
    %17 = arith.addf %10, %16 : vector<8x128xf32>
    %18 = vector.extract_strided_slice %1 {offsets = [2, 0, 0, 0], sizes = [1, 1, 8, 1], strides = [1, 1, 1, 1]} : vector<4x5x8x1xf32> to vector<1x1x8x1xf32>
    %19 = vector.shape_cast %18 : vector<1x1x8x1xf32> to vector<8x1xf32>
    %20 = vector.extract_strided_slice %3 {offsets = [2, 0], sizes = [1, 128], strides = [1, 1]} : vector<4x128xf32> to vector<1x128xf32>
    %21 = vector.broadcast %19 : vector<8x1xf32> to vector<8x128xf32>
    %22 = vector.broadcast %20 : vector<1x128xf32> to vector<8x128xf32>
    %23 = arith.mulf %21, %22 : vector<8x128xf32>
    %24 = arith.addf %17, %23 : vector<8x128xf32>
    %25 = vector.extract_strided_slice %1 {offsets = [3, 0, 0, 0], sizes = [1, 1, 8, 1], strides = [1, 1, 1, 1]} : vector<4x5x8x1xf32> to vector<1x1x8x1xf32>
    %26 = vector.shape_cast %25 : vector<1x1x8x1xf32> to vector<8x1xf32>
    %27 = vector.extract_strided_slice %3 {offsets = [3, 0], sizes = [1, 128], strides = [1, 1]} : vector<4x128xf32> to vector<1x128xf32>
    %28 = vector.broadcast %26 : vector<8x1xf32> to vector<8x128xf32>
    %29 = vector.broadcast %27 : vector<1x128xf32> to vector<8x128xf32>
    %30 = arith.mulf %28, %29 : vector<8x128xf32>
    %31 = arith.addf %24, %30 : vector<8x128xf32>
    %c0_6 = arith.constant 0 : index
    %c0_7 = arith.constant 0 : index
    %c1 = arith.constant 1 : index
    %32 = vector.load %arg1[%c0_6, %c0_7, %c1] : memref<1x4x256xf32, #tpu.memory_space<vmem>>, vector<1x4x128xf32>
    %33 = vector.shape_cast %32 : vector<1x4x128xf32> to vector<4x128xf32>
    %34 = vector.extract_strided_slice %1 {offsets = [0, 1, 0, 0], sizes = [1, 1, 8, 1], strides = [1, 1, 1, 1]} : vector<4x5x8x1xf32> to vector<1x1x8x1xf32>
    %35 = vector.shape_cast %34 : vector<1x1x8x1xf32> to vector<8x1xf32>
    %36 = vector.extract_strided_slice %33 {offsets = [0, 0], sizes = [1, 128], strides = [1, 1]} : vector<4x128xf32> to vector<1x128xf32>
    %37 = vector.broadcast %35 : vector<8x1xf32> to vector<8x128xf32>
    %38 = vector.broadcast %36 : vector<1x128xf32> to vector<8x128xf32>
    %39 = arith.mulf %37, %38 : vector<8x128xf32>
    %40 = arith.addf %31, %39 : vector<8x128xf32>
    %41 = vector.extract_strided_slice %1 {offsets = [1, 1, 0, 0], sizes = [1, 1, 8, 1], strides = [1, 1, 1, 1]} : vector<4x5x8x1xf32> to vector<1x1x8x1xf32>
    %42 = vector.shape_cast %41 : vector<1x1x8x1xf32> to vector<8x1xf32>
    %43 = vector.extract_strided_slice %33 {offsets = [1, 0], sizes = [1, 128], strides = [1, 1]} : vector<4x128xf32> to vector<1x128xf32>
    %44 = vector.broadcast %42 : vector<8x1xf32> to vector<8x128xf32>
    %45 = vector.broadcast %43 : vector<1x128xf32> to vector<8x128xf32>
    %46 = arith.mulf %44, %45 : vector<8x128xf32>
    %47 = arith.addf %40, %46 : vector<8x128xf32>
    %48 = vector.extract_strided_slice %1 {offsets = [2, 1, 0, 0], sizes = [1, 1, 8, 1], strides = [1, 1, 1, 1]} : vector<4x5x8x1xf32> to vector<1x1x8x1xf32>
    %49 = vector.shape_cast %48 : vector<1x1x8x1xf32> to vector<8x1xf32>
    %50 = vector.extract_strided_slice %33 {offsets = [2, 0], sizes = [1, 128], strides = [1, 1]} : vector<4x128xf32> to vector<1x128xf32>
    %51 = vector.broadcast %49 : vector<8x1xf32> to vector<8x128xf32>
    %52 = vector.broadcast %50 : vector<1x128xf32> to vector<8x128xf32>
    %53 = arith.mulf %51, %52 : vector<8x128xf32>
    %54 = arith.addf %47, %53 : vector<8x128xf32>
    %55 = vector.extract_strided_slice %1 {offsets = [3, 1, 0, 0], sizes = [1, 1, 8, 1], strides = [1, 1, 1, 1]} : vector<4x5x8x1xf32> to vector<1x1x8x1xf32>
    %56 = vector.shape_cast %55 : vector<1x1x8x1xf32> to vector<8x1xf32>
    %57 = vector.extract_strided_slice %33 {offsets = [3, 0], sizes = [1, 128], strides = [1, 1]} : vector<4x128xf32> to vector<1x128xf32>
    %58 = vector.broadcast %56 : vector<8x1xf32> to vector<8x128xf32>
    %59 = vector.broadcast %57 : vector<1x128xf32> to vector<8x128xf32>
    %60 = arith.mulf %58, %59 : vector<8x128xf32>
    %61 = arith.addf %54, %60 : vector<8x128xf32>
    %c0_8 = arith.constant 0 : index
    %c0_9 = arith.constant 0 : index
    %c2 = arith.constant 2 : index
    %62 = vector.load %arg1[%c0_8, %c0_9, %c2] : memref<1x4x256xf32, #tpu.memory_space<vmem>>, vector<1x4x128xf32>
    %63 = vector.shape_cast %62 : vector<1x4x128xf32> to vector<4x128xf32>
    %64 = vector.extract_strided_slice %1 {offsets = [0, 2, 0, 0], sizes = [1, 1, 8, 1], strides = [1, 1, 1, 1]} : vector<4x5x8x1xf32> to vector<1x1x8x1xf32>
    %65 = vector.shape_cast %64 : vector<1x1x8x1xf32> to vector<8x1xf32>
    %66 = vector.extract_strided_slice %63 {offsets = [0, 0], sizes = [1, 128], strides = [1, 1]} : vector<4x128xf32> to vector<1x128xf32>
    %67 = vector.broadcast %65 : vector<8x1xf32> to vector<8x128xf32>
    %68 = vector.broadcast %66 : vector<1x128xf32> to vector<8x128xf32>
    %69 = arith.mulf %67, %68 : vector<8x128xf32>
    %70 = arith.addf %61, %69 : vector<8x128xf32>
    %71 = vector.extract_strided_slice %1 {offsets = [1, 2, 0, 0], sizes = [1, 1, 8, 1], strides = [1, 1, 1, 1]} : vector<4x5x8x1xf32> to vector<1x1x8x1xf32>
    %72 = vector.shape_cast %71 : vector<1x1x8x1xf32> to vector<8x1xf32>
    %73 = vector.extract_strided_slice %63 {offsets = [1, 0], sizes = [1, 128], strides = [1, 1]} : vector<4x128xf32> to vector<1x128xf32>
    %74 = vector.broadcast %72 : vector<8x1xf32> to vector<8x128xf32>
    %75 = vector.broadcast %73 : vector<1x128xf32> to vector<8x128xf32>
    %76 = arith.mulf %74, %75 : vector<8x128xf32>
    %77 = arith.addf %70, %76 : vector<8x128xf32>
    %78 = vector.extract_strided_slice %1 {offsets = [2, 2, 0, 0], sizes = [1, 1, 8, 1], strides = [1, 1, 1, 1]} : vector<4x5x8x1xf32> to vector<1x1x8x1xf32>
    %79 = vector.shape_cast %78 : vector<1x1x8x1xf32> to vector<8x1xf32>
    %80 = vector.extract_strided_slice %63 {offsets = [2, 0], sizes = [1, 128], strides = [1, 1]} : vector<4x128xf32> to vector<1x128xf32>
    %81 = vector.broadcast %79 : vector<8x1xf32> to vector<8x128xf32>
    %82 = vector.broadcast %80 : vector<1x128xf32> to vector<8x128xf32>
    %83 = arith.mulf %81, %82 : vector<8x128xf32>
    %84 = arith.addf %77, %83 : vector<8x128xf32>
    %85 = vector.extract_strided_slice %1 {offsets = [3, 2, 0, 0], sizes = [1, 1, 8, 1], strides = [1, 1, 1, 1]} : vector<4x5x8x1xf32> to vector<1x1x8x1xf32>
    %86 = vector.shape_cast %85 : vector<1x1x8x1xf32> to vector<8x1xf32>
    %87 = vector.extract_strided_slice %63 {offsets = [3, 0], sizes = [1, 128], strides = [1, 1]} : vector<4x128xf32> to vector<1x128xf32>
    %88 = vector.broadcast %86 : vector<8x1xf32> to vector<8x128xf32>
    %89 = vector.broadcast %87 : vector<1x128xf32> to vector<8x128xf32>
    %90 = arith.mulf %88, %89 : vector<8x128xf32>
    %91 = arith.addf %84, %90 : vector<8x128xf32>
    %c0_10 = arith.constant 0 : index
    %c0_11 = arith.constant 0 : index
    %c3 = arith.constant 3 : index
    %92 = vector.load %arg1[%c0_10, %c0_11, %c3] : memref<1x4x256xf32, #tpu.memory_space<vmem>>, vector<1x4x128xf32>
    %93 = vector.shape_cast %92 : vector<1x4x128xf32> to vector<4x128xf32>
    %94 = vector.extract_strided_slice %1 {offsets = [0, 3, 0, 0], sizes = [1, 1, 8, 1], strides = [1, 1, 1, 1]} : vector<4x5x8x1xf32> to vector<1x1x8x1xf32>
    %95 = vector.shape_cast %94 : vector<1x1x8x1xf32> to vector<8x1xf32>
    %96 = vector.extract_strided_slice %93 {offsets = [0, 0], sizes = [1, 128], strides = [1, 1]} : vector<4x128xf32> to vector<1x128xf32>
    %97 = vector.broadcast %95 : vector<8x1xf32> to vector<8x128xf32>
    %98 = vector.broadcast %96 : vector<1x128xf32> to vector<8x128xf32>
    %99 = arith.mulf %97, %98 : vector<8x128xf32>
    %100 = arith.addf %91, %99 : vector<8x128xf32>
    %101 = vector.extract_strided_slice %1 {offsets = [1, 3, 0, 0], sizes = [1, 1, 8, 1], strides = [1, 1, 1, 1]} : vector<4x5x8x1xf32> to vector<1x1x8x1xf32>
    %102 = vector.shape_cast %101 : vector<1x1x8x1xf32> to vector<8x1xf32>
    %103 = vector.extract_strided_slice %93 {offsets = [1, 0], sizes = [1, 128], strides = [1, 1]} : vector<4x128xf32> to vector<1x128xf32>
    %104 = vector.broadcast %102 : vector<8x1xf32> to vector<8x128xf32>
    %105 = vector.broadcast %103 : vector<1x128xf32> to vector<8x128xf32>
    %106 = arith.mulf %104, %105 : vector<8x128xf32>
    %107 = arith.addf %100, %106 : vector<8x128xf32>
    %108 = vector.extract_strided_slice %1 {offsets = [2, 3, 0, 0], sizes = [1, 1, 8, 1], strides = [1, 1, 1, 1]} : vector<4x5x8x1xf32> to vector<1x1x8x1xf32>
    %109 = vector.shape_cast %108 : vector<1x1x8x1xf32> to vector<8x1xf32>
    %110 = vector.extract_strided_slice %93 {offsets = [2, 0], sizes = [1, 128], strides = [1, 1]} : vector<4x128xf32> to vector<1x128xf32>
    %111 = vector.broadcast %109 : vector<8x1xf32> to vector<8x128xf32>
    %112 = vector.broadcast %110 : vector<1x128xf32> to vector<8x128xf32>
    %113 = arith.mulf %111, %112 : vector<8x128xf32>
    %114 = arith.addf %107, %113 : vector<8x128xf32>
    %115 = vector.extract_strided_slice %1 {offsets = [3, 3, 0, 0], sizes = [1, 1, 8, 1], strides = [1, 1, 1, 1]} : vector<4x5x8x1xf32> to vector<1x1x8x1xf32>
    %116 = vector.shape_cast %115 : vector<1x1x8x1xf32> to vector<8x1xf32>
    %117 = vector.extract_strided_slice %93 {offsets = [3, 0], sizes = [1, 128], strides = [1, 1]} : vector<4x128xf32> to vector<1x128xf32>
    %118 = vector.broadcast %116 : vector<8x1xf32> to vector<8x128xf32>
    %119 = vector.broadcast %117 : vector<1x128xf32> to vector<8x128xf32>
    %120 = arith.mulf %118, %119 : vector<8x128xf32>
    %121 = arith.addf %114, %120 : vector<8x128xf32>
    %c0_12 = arith.constant 0 : index
    %c0_13 = arith.constant 0 : index
    %c4 = arith.constant 4 : index
    %122 = vector.load %arg1[%c0_12, %c0_13, %c4] : memref<1x4x256xf32, #tpu.memory_space<vmem>>, vector<1x4x128xf32>
    %123 = vector.shape_cast %122 : vector<1x4x128xf32> to vector<4x128xf32>
    %124 = vector.extract_strided_slice %1 {offsets = [0, 4, 0, 0], sizes = [1, 1, 8, 1], strides = [1, 1, 1, 1]} : vector<4x5x8x1xf32> to vector<1x1x8x1xf32>
    %125 = vector.shape_cast %124 : vector<1x1x8x1xf32> to vector<8x1xf32>
    %126 = vector.extract_strided_slice %123 {offsets = [0, 0], sizes = [1, 128], strides = [1, 1]} : vector<4x128xf32> to vector<1x128xf32>
    %127 = vector.broadcast %125 : vector<8x1xf32> to vector<8x128xf32>
    %128 = vector.broadcast %126 : vector<1x128xf32> to vector<8x128xf32>
    %129 = arith.mulf %127, %128 : vector<8x128xf32>
    %130 = arith.addf %121, %129 : vector<8x128xf32>
    %131 = vector.extract_strided_slice %1 {offsets = [1, 4, 0, 0], sizes = [1, 1, 8, 1], strides = [1, 1, 1, 1]} : vector<4x5x8x1xf32> to vector<1x1x8x1xf32>
    %132 = vector.shape_cast %131 : vector<1x1x8x1xf32> to vector<8x1xf32>
    %133 = vector.extract_strided_slice %123 {offsets = [1, 0], sizes = [1, 128], strides = [1, 1]} : vector<4x128xf32> to vector<1x128xf32>
    %134 = vector.broadcast %132 : vector<8x1xf32> to vector<8x128xf32>
    %135 = vector.broadcast %133 : vector<1x128xf32> to vector<8x128xf32>
    %136 = arith.mulf %134, %135 : vector<8x128xf32>
    %137 = arith.addf %130, %136 : vector<8x128xf32>
    %138 = vector.extract_strided_slice %1 {offsets = [2, 4, 0, 0], sizes = [1, 1, 8, 1], strides = [1, 1, 1, 1]} : vector<4x5x8x1xf32> to vector<1x1x8x1xf32>
    %139 = vector.shape_cast %138 : vector<1x1x8x1xf32> to vector<8x1xf32>
    %140 = vector.extract_strided_slice %123 {offsets = [2, 0], sizes = [1, 128], strides = [1, 1]} : vector<4x128xf32> to vector<1x128xf32>
    %141 = vector.broadcast %139 : vector<8x1xf32> to vector<8x128xf32>
    %142 = vector.broadcast %140 : vector<1x128xf32> to vector<8x128xf32>
    %143 = arith.mulf %141, %142 : vector<8x128xf32>
    %144 = arith.addf %137, %143 : vector<8x128xf32>
    %145 = vector.extract_strided_slice %1 {offsets = [3, 4, 0, 0], sizes = [1, 1, 8, 1], strides = [1, 1, 1, 1]} : vector<4x5x8x1xf32> to vector<1x1x8x1xf32>
    %146 = vector.shape_cast %145 : vector<1x1x8x1xf32> to vector<8x1xf32>
    %147 = vector.extract_strided_slice %123 {offsets = [3, 0], sizes = [1, 128], strides = [1, 1]} : vector<4x128xf32> to vector<1x128xf32>
    %148 = vector.broadcast %146 : vector<8x1xf32> to vector<8x128xf32>
    %149 = vector.broadcast %147 : vector<1x128xf32> to vector<8x128xf32>
    %150 = arith.mulf %148, %149 : vector<8x128xf32>
    %151 = arith.addf %144, %150 : vector<8x128xf32>
    %c0_14 = arith.constant 0 : index
    %c0_15 = arith.constant 0 : index
    %152 = vector.load %arg3[%c0_14, %c0_15] : memref<8x1xf32, #tpu.memory_space<vmem>>, vector<8x1xf32>
    %153 = vector.broadcast %152 : vector<8x1xf32> to vector<8x128xf32>
    %154 = arith.addf %151, %153 : vector<8x128xf32>
    %cst_16 = arith.constant 0.000000e+00 : f32
    %155 = vector.broadcast %cst_16 : f32 to vector<8x128xf32>
    %156 = arith.maximumf %154, %155 : vector<8x128xf32>
    %c0_17 = arith.constant 0 : index
    %c0_18 = arith.constant 0 : index
    %c0_19 = arith.constant 0 : index
    %157 = vector.load %arg4[%c0_17, %c0_18, %c0_19] : memref<1x8x128xf32, #tpu.memory_space<vmem>>, vector<1x8x128xf32>
    %158 = vector.shape_cast %157 : vector<1x8x128xf32> to vector<8x128xf32>
    %159 = vector.shape_cast %156 : vector<8x128xf32> to vector<1x8x128xf32>
    tpu.vector_store %arg4[%c0_17, %c0_18, %c0_19], %159 {strides = array<i32>} : memref<1x8x128xf32, #tpu.memory_space<vmem>>, vector<1x8x128xf32>,
    return
  }
  func.func @transform_0(%arg0: i32) -> (i32, i32, i32) {
    %c0_i32 = arith.constant 0 : i32
    %c0_i32_0 = arith.constant 0 : i32
    %c0_i32_1 = arith.constant 0 : i32
    return %arg0, %c0_i32, %c0_i32_0 : i32, i32, i32
  }
  func.func @transform_1(%arg0: i32) -> (i32, i32, i32, i32) {
    %c0_i32 = arith.constant 0 : i32
    %c0_i32_0 = arith.constant 0 : i32
    %c0_i32_1 = arith.constant 0 : i32
    %c0_i32_2 = arith.constant 0 : i32
    %c0_i32_3 = arith.constant 0 : i32
    return %c0_i32, %c0_i32_0, %c0_i32_1, %c0_i32_2 : i32, i32, i32, i32
  }
  func.func @transform_2(%arg0: i32) -> (i32, i32) {
    %c0_i32 = arith.constant 0 : i32
    %c0_i32_0 = arith.constant 0 : i32
    %c0_i32_1 = arith.constant 0 : i32
    return %c0_i32, %c0_i32_0 : i32, i32
  }
  func.func @transform_3(%arg0: i32) -> (i32, i32, i32) {
    %c0_i32 = arith.constant 0 : i32
    %c0_i32_0 = arith.constant 0 : i32
    %c0_i32_1 = arith.constant 0 : i32
    return %arg0, %c0_i32, %c0_i32_0 : i32, i32, i32
  }
}

</mosaic_0001>

<llo_original>
// kernel: tpu_custom_call.1
$region0: #{tpu_custom_call.1}
  #allocation0 [shape = 'u32[]', space=smem, size = 0x4, offset = 0x4, fixed_abs, tag = 'smem constant byte address 0x4 - core index']
  #allocation1 [shape = 'u32[144,128]{1,0:T(1,128)}', space=vmem, size = 0x12000, scoped, tag = 'internal scratch']
  %s0 = inlined_call_operand.vmem [shape: f32[1,4,256], index: 0, kind: input, shape index: {}]
  %s1 = inlined_call_operand.vmem [shape: f32[4,5,8,1], index: 1, kind: input, shape index: {}]
  %s2 = inlined_call_operand.vmem [shape: f32[8,1], index: 2, kind: input, shape index: {}]
  %s3 = inlined_call_operand.hbm [shape: f32[1,8,128], index: 3, kind: output, shape index: {}]
  %s4 = sld [smem:[#allocation0]]
  $region22: #{tpu_custom_call.1} parent=0
    _
  %s6 = ssub.s32 1, %s4
  %s7 = scalar_select 0, %s6, %s4
  $region1: #{tpu_custom_call.1} parent=0
    #allocation2 [shape = 'u8[4096]{0}', space=vmem, size = 0x1000, scoped, tag = 'output window, operand 0, single buffered']
    #allocation3 [shape = 's32[1]{0}', space=sflag, size = 0x4, scoped, tag = 'scoped memory for tpu_custom_call.1']
    %8 = vsyncpa [#allocation3], 0
    // Predicated region
    $region2: #{tpu_custom_call.1} parent=1 // pred_check
      _
    $region3: #{tpu_custom_call.1} parent=1 // pred_check_branch
      %10 = sbr.rel (0) target = $region5
    $region4: #{tpu_custom_call.1} parent=1 // pred_region
      _
    $region5: #{tpu_custom_call.1} parent=1 // pred_fallthru
      _
    // Predicated region
    $region6: #{tpu_custom_call.1} parent=1 // pred_check
      _
    $region7: #{tpu_custom_call.1} parent=1 // pred_check_branch
      %12 = sbr.rel (0) target = $region9
    $region8: #{tpu_custom_call.1} parent=1 // pred_region
      _
    $region9: #{tpu_custom_call.1} parent=1 // pred_fallthru
      _
    // Predicated region
    $region10: #{tpu_custom_call.1} parent=1 // pred_check
      _
    $region11: #{tpu_custom_call.1} parent=1 // pred_check_branch
      %14 = sbr.rel (0) target = $region13
    $region12: #{tpu_custom_call.1} parent=1 // pred_region
      _
    $region13: #{tpu_custom_call.1} parent=1 // pred_fallthru
      _
    %v15 = vld [vmem:[%s1] sm:$0xff]
    %v16 = vld [vmem:[%s1 + $0x8] sm:$0xff]
    %v17 = vld [vmem:[%s1 + $0x10] sm:$0xff]
    %v18 = vld [vmem:[%s1 + $0x18] sm:$0xff]
    %v19 = vld [vmem:[%s1 + $0x20] sm:$0xff]
    %v20 = vld [vmem:[%s1 + $0x28] sm:$0xff]
    %v21 = vld [vmem:[%s1 + $0x30] sm:$0xff]
    %v22 = vld [vmem:[%s1 + $0x38] sm:$0xff]
    %v23 = vld [vmem:[%s1 + $0x40] sm:$0xff]
    %v24 = vld [vmem:[%s1 + $0x48] sm:$0xff]
    %v25 = vld [vmem:[%s1 + $0x50] sm:$0xff]
    %v26 = vld [vmem:[%s1 + $0x58] sm:$0xff]
    %v27 = vld [vmem:[%s1 + $0x60] sm:$0xff]
    %v28 = vld [vmem:[%s1 + $0x68] sm:$0xff]
    %v29 = vld [vmem:[%s1 + $0x70] sm:$0xff]
    %v30 = vld [vmem:[%s1 + $0x78] sm:$0xff]
    %v31 = vld [vmem:[%s1 + $0x80] sm:$0xff]
    %v32 = vld [vmem:[%s1 + $0x88] sm:$0xff]
    %v33 = vld [vmem:[%s1 + $0x90] sm:$0xff]
    %v34 = vld [vmem:[%s1 + $0x98] sm:$0xff]
    %v35 = vld [vmem:[%s0] sm:$0xf]
    %37 = vset.pattern.permute.xlu0 0
    %38 = vperm.xlu0 %37, %v15
    %v39 = vpop.permute.xlu0 %38
    %v41 = vlaneseq
    %v42 = vshrl.u32 %v41, 7
    %v43 = vsub.s32 0, %v42
    %v44 = vrot.slane %v35, %v43
    %v45 = vmul.f32 %v39, %v44
    %v46 = vadd.f32 %v45, 0.0
    %48 = vset.pattern.permute.xlu0 0
    %49 = vperm.xlu0 %48, %v20
    %v50 = vpop.permute.xlu0 %49
    %v52 = vlaneseq
    %v53 = vshrl.u32 %v52, 7
    %v54 = vsub.s32 1, %v53
    %v55 = vrot.slane %v35, %v54
    %v56 = vmul.f32 %v50, %v55
    %v57 = vadd.f32 %v46, %v56
    %59 = vset.pattern.permute.xlu0 0
    %60 = vperm.xlu0 %59, %v25
    %v61 = vpop.permute.xlu0 %60
    %v63 = vlaneseq
    %v64 = vshrl.u32 %v63, 7
    %v65 = vsub.s32 2, %v64
    %v66 = vrot.slane %v35, %v65
    %v67 = vmul.f32 %v61, %v66
    %v68 = vadd.f32 %v57, %v67
    %70 = vset.pattern.permute.xlu0 0
    %71 = vperm.xlu0 %70, %v30
    %v72 = vpop.permute.xlu0 %71
    %v74 = vlaneseq
    %v75 = vshrl.u32 %v74, 7
    %v76 = vsub.s32 3, %v75
    %v77 = vrot.slane %v35, %v76
    %v78 = vmul.f32 %v72, %v77
    %v79 = vadd.f32 %v68, %v78
    %v80 = vld [vmem:[%s0] sm:$0xff]
    %82 = vset.pattern.permute.xlu0 0
    %83 = vperm.xlu0 %82, %v16
    %v84 = vpop.permute.xlu0 %83
    %v87 = vlaneseq
    %v88 = vshrl.u32 %v87, 7
    %v89 = vsub.s32 0, %v88
    %v90 = vrot.slane %v80, %v89
    %v91 = vlaneseq
    %v92 = vshrl.u32 %v91, 7
    %v93 = vsub.s32 4, %v92
    %v94 = vrot.slane %v80, %v93
    %v97 = vlaneseq
    %v98 = vshrl.u32 %v97, 7
    %v99 = vsub.s32 0, %v98
    %v100 = vrot.slane %v90, %v99
    %v101 = vlaneseq
    %v102 = vshrl.u32 %v101, 7
    %v103 = vsub.s32 0, %v102
    %v104 = vrot.slane %v94, %v103
    %v105 = vmul.f32 %v84, %v100
    %v106 = vmul.f32 %v84, %v104
    %109 = vrot.lane.b32.xlu0 %v105, 127
    %v110 = vpop.permute.xlu0 %109
    %111 = vrot.lane.b32.xlu0 %v106, 127
    %v112 = vpop.permute.xlu0 %111
    %vm113 = vcmask 1039360
    %v114 = vsel %vm113, %v110, %v112
    %v116 = vadd.f32 %v79, %v114
    %118 = vset.pattern.permute.xlu0 0
    %119 = vperm.xlu0 %118, %v21
    %v120 = vpop.permute.xlu0 %119
    %v122 = vlaneseq
    %v123 = vshrl.u32 %v122, 7
    %v124 = vsub.s32 1, %v123
    %v125 = vrot.slane %v80, %v124
    %v126 = vlaneseq
    %v127 = vshrl.u32 %v126, 7
    %v128 = vsub.s32 5, %v127
    %v129 = vrot.slane %v80, %v128
    %v132 = vlaneseq
    %v133 = vshrl.u32 %v132, 7
    %v134 = vsub.s32 1, %v133
    %v135 = vrot.slane %v125, %v134
    %v136 = vlaneseq
    %v137 = vshrl.u32 %v136, 7
    %v138 = vsub.s32 1, %v137
    %v139 = vrot.slane %v129, %v138
    %v140 = vmul.f32 %v120, %v135
    %v141 = vmul.f32 %v120, %v139
    %144 = vrot.lane.b32.xlu0 %v140, 127
    %v145 = vpop.permute.xlu0 %144
    %146 = vrot.lane.b32.xlu0 %v141, 127
    %v147 = vpop.permute.xlu0 %146
    %v148 = vsel %vm113, %v145, %v147
    %v150 = vadd.f32 %v116, %v148
    %152 = vset.pattern.permute.xlu0 0
    %153 = vperm.xlu0 %152, %v26
    %v154 = vpop.permute.xlu0 %153
    %v156 = vlaneseq
    %v157 = vshrl.u32 %v156, 7
    %v158 = vsub.s32 2, %v157
    %v159 = vrot.slane %v80, %v158
    %v160 = vlaneseq
    %v161 = vshrl.u32 %v160, 7
    %v162 = vsub.s32 6, %v161
    %v163 = vrot.slane %v80, %v162
    %v166 = vlaneseq
    %v167 = vshrl.u32 %v166, 7
    %v168 = vsub.s32 2, %v167
    %v169 = vrot.slane %v159, %v168
    %v170 = vlaneseq
    %v171 = vshrl.u32 %v170, 7
    %v172 = vsub.s32 2, %v171
    %v173 = vrot.slane %v163, %v172
    %v174 = vmul.f32 %v154, %v169
    %v175 = vmul.f32 %v154, %v173
    %178 = vrot.lane.b32.xlu0 %v174, 127
    %v179 = vpop.permute.xlu0 %178
    %180 = vrot.lane.b32.xlu0 %v175, 127
    %v181 = vpop.permute.xlu0 %180
    %v182 = vsel %vm113, %v179, %v181
    %v184 = vadd.f32 %v150, %v182
    %186 = vset.pattern.permute.xlu0 0
    %187 = vperm.xlu0 %186, %v31
    %v188 = vpop.permute.xlu0 %187
    %v190 = vlaneseq
    %v191 = vshrl.u32 %v190, 7
    %v192 = vsub.s32 3, %v191
    %v193 = vrot.slane %v80, %v192
    %v194 = vlaneseq
    %v195 = vshrl.u32 %v194, 7
    %v196 = vsub.s32 7, %v195
    %v197 = vrot.slane %v80, %v196
    %v200 = vlaneseq
    %v201 = vshrl.u32 %v200, 7
    %v202 = vsub.s32 3, %v201
    %v203 = vrot.slane %v193, %v202
    %v204 = vlaneseq
    %v205 = vshrl.u32 %v204, 7
    %v206 = vsub.s32 3, %v205
    %v207 = vrot.slane %v197, %v206
    %v208 = vmul.f32 %v188, %v203
    %v209 = vmul.f32 %v188, %v207
    %212 = vrot.lane.b32.xlu0 %v208, 127
    %v213 = vpop.permute.xlu0 %212
    %214 = vrot.lane.b32.xlu0 %v209, 127
    %v215 = vpop.permute.xlu0 %214
    %v216 = vsel %vm113, %v213, %v215
    %v218 = vadd.f32 %v184, %v216
    %220 = vset.pattern.permute.xlu0 0
    %221 = vperm.xlu0 %220, %v17
    %v222 = vpop.permute.xlu0 %221
    %v224 = vmul.f32 %v222, %v100
    %v225 = vmul.f32 %v222, %v104
    %228 = vrot.lane.b32.xlu0 %v224, 126
    %v229 = vpop.permute.xlu0 %228
    %230 = vrot.lane.b32.xlu0 %v225, 126
    %v231 = vpop.permute.xlu0 %230
    %vm232 = vcmask 1031168
    %v233 = vsel %vm232, %v229, %v231
    %v235 = vadd.f32 %v218, %v233
    %237 = vset.pattern.permute.xlu0 0
    %238 = vperm.xlu0 %237, %v22
    %v239 = vpop.permute.xlu0 %238
    %v241 = vmul.f32 %v239, %v135
    %v242 = vmul.f32 %v239, %v139
    %245 = vrot.lane.b32.xlu0 %v241, 126
    %v246 = vpop.permute.xlu0 %245
    %247 = vrot.lane.b32.xlu0 %v242, 126
    %v248 = vpop.permute.xlu0 %247
    %v249 = vsel %vm232, %v246, %v248
    %v251 = vadd.f32 %v235, %v249
    %253 = vset.pattern.permute.xlu0 0
    %254 = vperm.xlu0 %253, %v27
    %v255 = vpop.permute.xlu0 %254
    %v257 = vmul.f32 %v255, %v169
    %v258 = vmul.f32 %v255, %v173
    %261 = vrot.lane.b32.xlu0 %v257, 126
    %v262 = vpop.permute.xlu0 %261
    %263 = vrot.lane.b32.xlu0 %v258, 126
    %v264 = vpop.permute.xlu0 %263
    %v265 = vsel %vm232, %v262, %v264
    %v267 = vadd.f32 %v251, %v265
    %269 = vset.pattern.permute.xlu0 0
    %270 = vperm.xlu0 %269, %v32
    %v271 = vpop.permute.xlu0 %270
    %v273 = vmul.f32 %v271, %v203
    %v274 = vmul.f32 %v271, %v207
    %277 = vrot.lane.b32.xlu0 %v273, 126
    %v278 = vpop.permute.xlu0 %277
    %279 = vrot.lane.b32.xlu0 %v274, 126
    %v280 = vpop.permute.xlu0 %279
    %v281 = vsel %vm232, %v278, %v280
    %v283 = vadd.f32 %v267, %v281
    %285 = vset.pattern.permute.xlu0 0
    %286 = vperm.xlu0 %285, %v18
    %v287 = vpop.permute.xlu0 %286
    %v289 = vmul.f32 %v287, %v100
    %v290 = vmul.f32 %v287, %v104
    %293 = vrot.lane.b32.xlu0 %v289, 125
    %v294 = vpop.permute.xlu0 %293
    %295 = vrot.lane.b32.xlu0 %v290, 125
    %v296 = vpop.permute.xlu0 %295
    %vm297 = vcmask 1022976
    %v298 = vsel %vm297, %v294, %v296
    %v300 = vadd.f32 %v283, %v298
    %302 = vset.pattern.permute.xlu0 0
    %303 = vperm.xlu0 %302, %v23
    %v304 = vpop.permute.xlu0 %303
    %v306 = vmul.f32 %v304, %v135
    %v307 = vmul.f32 %v304, %v139
    %310 = vrot.lane.b32.xlu0 %v306, 125
    %v311 = vpop.permute.xlu0 %310
    %312 = vrot.lane.b32.xlu0 %v307, 125
    %v313 = vpop.permute.xlu0 %312
    %v314 = vsel %vm297, %v311, %v313
    %v316 = vadd.f32 %v300, %v314
    %318 = vset.pattern.permute.xlu0 0
    %319 = vperm.xlu0 %318, %v28
    %v320 = vpop.permute.xlu0 %319
    %v322 = vmul.f32 %v320, %v169
    %v323 = vmul.f32 %v320, %v173
    %326 = vrot.lane.b32.xlu0 %v322, 125
    %v327 = vpop.permute.xlu0 %326
    %328 = vrot.lane.b32.xlu0 %v323, 125
    %v329 = vpop.permute.xlu0 %328
    %v330 = vsel %vm297, %v327, %v329
    %v332 = vadd.f32 %v316, %v330
    %334 = vset.pattern.permute.xlu0 0
    %335 = vperm.xlu0 %334, %v33
    %v336 = vpop.permute.xlu0 %335
    %v338 = vmul.f32 %v336, %v203
    %v339 = vmul.f32 %v336, %v207
    %342 = vrot.lane.b32.xlu0 %v338, 125
    %v343 = vpop.permute.xlu0 %342
    %344 = vrot.lane.b32.xlu0 %v339, 125
    %v345 = vpop.permute.xlu0 %344
    %v346 = vsel %vm297, %v343, %v345
    %v348 = vadd.f32 %v332, %v346
    %350 = vset.pattern.permute.xlu0 0
    %351 = vperm.xlu0 %350, %v19
    %v352 = vpop.permute.xlu0 %351
    %v354 = vmul.f32 %v352, %v100
    %v355 = vmul.f32 %v352, %v104
    %358 = vrot.lane.b32.xlu0 %v354, 124
    %v359 = vpop.permute.xlu0 %358
    %360 = vrot.lane.b32.xlu0 %v355, 124
    %v361 = vpop.permute.xlu0 %360
    %vm362 = vcmask 1014784
    %v363 = vsel %vm362, %v359, %v361
    %v365 = vadd.f32 %v348, %v363
    %367 = vset.pattern.permute.xlu0 0
    %368 = vperm.xlu0 %367, %v24
    %v369 = vpop.permute.xlu0 %368
    %v371 = vmul.f32 %v369, %v135
    %v372 = vmul.f32 %v369, %v139
    %375 = vrot.lane.b32.xlu0 %v371, 124
    %v376 = vpop.permute.xlu0 %375
    %377 = vrot.lane.b32.xlu0 %v372, 124
    %v378 = vpop.permute.xlu0 %377
    %v379 = vsel %vm362, %v376, %v378
    %v381 = vadd.f32 %v365, %v379
    %383 = vset.pattern.permute.xlu0 0
    %384 = vperm.xlu0 %383, %v29
    %v385 = vpop.permute.xlu0 %384
    %v387 = vmul.f32 %v385, %v169
    %v388 = vmul.f32 %v385, %v173
    %391 = vrot.lane.b32.xlu0 %v387, 124
    %v392 = vpop.permute.xlu0 %391
    %393 = vrot.lane.b32.xlu0 %v388, 124
    %v394 = vpop.permute.xlu0 %393
    %v395 = vsel %vm362, %v392, %v394
    %v397 = vadd.f32 %v381, %v395
    %399 = vset.pattern.permute.xlu0 0
    %400 = vperm.xlu0 %399, %v34
    %v401 = vpop.permute.xlu0 %400
    %v403 = vmul.f32 %v401, %v203
    %v404 = vmul.f32 %v401, %v207
    %407 = vrot.lane.b32.xlu0 %v403, 124
    %v408 = vpop.permute.xlu0 %407
    %409 = vrot.lane.b32.xlu0 %v404, 124
    %v410 = vpop.permute.xlu0 %409
    %v411 = vsel %vm362, %v408, %v410
    %v413 = vadd.f32 %v397, %v411
    %v414 = vld [vmem:[%s2] sm:$0xff]
    %416 = vset.pattern.permute.xlu0 0
    %417 = vperm.xlu0 %416, %v414
    %v418 = vpop.permute.xlu0 %417
    %v420 = vadd.f32 %v413, %v418
    %v421 = vmax.f32 %v420, 0.0
    %422 = vst [vmem:[#allocation2] sm:$0xff] %v421
    // Predicated region
    $region14: #{tpu_custom_call.1} parent=1 // pred_check
      _
    $region15: #{tpu_custom_call.1} parent=1 // pred_check_branch
      %424 = sbr.rel (0) target = $region17
    $region16: #{tpu_custom_call.1} parent=1 // pred_region
      %s426 = ssub.s32 128, 128
      %427 = vsyncadd [#allocation3], %s426
      %s429 = sshll.u32 [#allocation2], 4
      %s430 = int_to_ptr.vmem [resolvable:$true] %s429
      %432 = dma.vmem_to_hbm [thread:$0]  %s430, 128, %s3, [#allocation3]
    $region17: #{tpu_custom_call.1} parent=1 // pred_fallthru
      _
    // Predicated region
    $region18: #{tpu_custom_call.1} parent=1 // pred_check
      _
    $region19: #{tpu_custom_call.1} parent=1 // pred_check_branch
      %434 = sbr.rel (0) target = $region21
    $region20: #{tpu_custom_call.1} parent=1 // pred_region
      %435 = dma.done [#allocation3], 128
    $region21: #{tpu_custom_call.1} parent=1 // pred_fallthru
      _
    %436 = vsyncpa [#allocation3], 1

</llo_original>
